<compile_context>
chip_gen: v7x
topology: tpu7x:2x2x1
jax: 0.10.0
libtpu: 0.0.40
codegen_flags: <defaults>
</compile_context>

<pallas_src>
import functools

import jax
import jax.numpy as jnp
import numpy as np
from jax.experimental import pallas as pl
from jax.experimental.pallas import tpu as pltpu


def _round_up(x, m):
    return (x + m - 1) // m * m


def _cdiv(a, b):
    return (a + b - 1) // b


# ----------------------------------------------------------------------------
# Pallas kernel: fused fc1 + residual blocks + lane-dense fc2 head
# ----------------------------------------------------------------------------
def _mlp_kernel(x_ref, w1_ref, b1_ref,
                rbw1_ref, rbb1_ref, rbw2_ref, rbb2_ref,
                w2_ref, b2_ref, o_ref):
    # fc1 over the fused [x_num | cat tokens] stream, f32 accumulation.
    h = jnp.dot(x_ref[...], w1_ref[...],
                preferred_element_type=jnp.float32) + b1_ref[...]

    # Residual blocks (static unroll; at n_blocks=3 live ranges are small.
    # Switch to lax.fori_loop with dynamic rbw1_ref[i] indexing if n_blocks
    # grows large enough to risk vreg spills.)
    n_blocks = rbw1_ref.shape[0]
    for i in range(n_blocks):
        z = jnp.dot(h.astype(rbw1_ref.dtype), rbw1_ref[i],
                    preferred_element_type=jnp.float32) + rbb1_ref[i]
        z = jnp.maximum(z, 0.0)                 # ReLU
        # Dropout(p=0.1): identity in eval / inference mode
        z = jnp.dot(z.astype(rbw2_ref.dtype), rbw2_ref[i],
                    preferred_element_type=jnp.float32) + rbb2_ref[i]
        h = h + z                               # residual add (f32)

    # fc2 head: w2 is pre-transposed and lane-padded to (d_hidden_pad, 128),
    # so this is one dense MXU pass and a full-lane (unmasked) output store.
    out = jnp.dot(h.astype(w2_ref.dtype), w2_ref[...],
                  preferred_element_type=jnp.float32) + b2_ref[...]
    o_ref[...] = out.astype(o_ref.dtype)


def mlp_forward(x, kparams, *, block_b=2048):
    """x: (B, d_in) bf16 fused activation stream. Returns (B, d_out_pad) f32."""
    (w1, b1, rbw1, rbb1, rbw2, rbb2, w2, b2) = kparams
    B, d_in = x.shape
    d_h = w1.shape[1]
    n_blocks = rbw1.shape[0]
    d_out_pad = w2.shape[1]

    # Batch tile: big to amortize per-step overhead, multiple of 16 (bf16
    # sublane pack), and sized so large batches get >=2 grid steps (v7x: both
    # TensorCores busy under dimension_semantics=("parallel",)).
    TB = min(block_b, max(16, _round_up(_cdiv(B, 2), 16)))
    B_pad = _round_up(B, TB)
    if B_pad != B:
        x = jnp.pad(x, ((0, B_pad - B), (0, 0)))

    def stream_spec(shape):
        return pl.BlockSpec(shape, lambda i: (i, 0))

    def resident_spec(a):
        nd = a.ndim
        return pl.BlockSpec(a.shape, lambda i: (0,) * nd)

    weights = (w1, b1, rbw1, rbb1, rbw2, rbb2, w2, b2)
    in_specs = [stream_spec((TB, d_in))] + [resident_spec(a) for a in weights]

    flops = 2 * B_pad * (d_in * d_h + 2 * n_blocks * d_h * d_h + d_h * d_out_pad)
    bytes_accessed = (int(x.size) * x.dtype.itemsize
                      + B_pad * d_out_pad * 4
                      + sum(int(a.size) * a.dtype.itemsize for a in weights))

    out = pl.pallas_call(
        _mlp_kernel,
        out_shape=jax.ShapeDtypeStruct((B_pad, d_out_pad), jnp.float32),
        grid_spec=pltpu.PrefetchScalarGridSpec(
            num_scalar_prefetch=0,
            grid=(B_pad // TB,),
            in_specs=in_specs,
            out_specs=pl.BlockSpec((TB, d_out_pad), lambda i: (i, 0)),
        ),
        compiler_params=pltpu.CompilerParams(
            dimension_semantics=("parallel",)),
        cost_estimate=pl.CostEstimate(
            flops=flops, transcendentals=0, bytes_accessed=bytes_accessed),
    )(x, *weights)
    return out[:B]


# ----------------------------------------------------------------------------
# Categorical tokenizer (rtdl-style): per-feature embedding lookup (glue, JAX)
# ----------------------------------------------------------------------------
def cat_tokenize(x_cat, emb_table, offsets):
    # x_cat: (B, n_tokens) int32 ; emb_table: (sum(cardinalities), d_token)
    idx = x_cat + offsets[None, :]               # (B, n_tokens)
    return jnp.take(emb_table, idx, axis=0)      # (B, n_tokens, d_token)


# ----------------------------------------------------------------------------
# Deterministic f32 master parameters
# ----------------------------------------------------------------------------
def init_params(key, n_num_features, d_hidden, n_blocks, d_out,
                cat_cardinalities, d_token):
    keys = jax.random.split(key, 12)
    s = 0.05
    d_in = n_num_features + len(cat_cardinalities) * d_token
    w1 = jax.random.normal(keys[0], (d_in, d_hidden), jnp.float32) * s
    b1 = jax.random.normal(keys[1], (1, d_hidden), jnp.float32) * s
    rbw1 = jax.random.normal(keys[2], (n_blocks, d_hidden, d_hidden), jnp.float32) * s
    rbb1 = jax.random.normal(keys[3], (n_blocks, 1, d_hidden), jnp.float32) * s
    rbw2 = jax.random.normal(keys[4], (n_blocks, d_hidden, d_hidden), jnp.float32) * s
    rbb2 = jax.random.normal(keys[5], (n_blocks, 1, d_hidden), jnp.float32) * s
    w2 = jax.random.normal(keys[6], (d_hidden, d_out), jnp.float32) * s
    b2 = jax.random.normal(keys[7], (1, d_out), jnp.float32) * s

    total_cats = int(sum(cat_cardinalities))
    emb_table = jax.random.normal(keys[8], (total_cats, d_token), jnp.float32) * s
    offsets = jnp.array(
        np.concatenate([[0], np.cumsum(np.array(cat_cardinalities))[:-1]]),
        jnp.int32)
    params = (w1, b1, rbw1, rbb1, rbw2, rbb2, w2, b2)
    return params, emb_table, offsets


def prepare_params(params, *, pad_hidden_to=128, lane=128):
    """One-time kernel-param prep: zero-pad d_hidden / d_out, cast MXU weights to bf16.

    Zero-padding is mathematically exact (padded hidden columns stay 0 through
    every residual block) and makes matmuls / the output store lane-dense.
    Set pad_hidden_to=None on v5e where the 128-wide MXU is already half-filled
    at d_hidden=64.
    """
    (w1, b1, rbw1, rbb1, rbw2, rbb2, w2, b2) = params
    d_h = w1.shape[1]
    d_out = w2.shape[1]

    d_hp = _round_up(d_h, pad_hidden_to) if pad_hidden_to else d_h
    d_op = _round_up(d_out, lane)
    ph = d_hp - d_h
    po = d_op - d_out

    w1 = jnp.pad(w1, ((0, 0), (0, ph)))
    b1 = jnp.pad(b1, ((0, 0), (0, ph)))
    rbw1 = jnp.pad(rbw1, ((0, 0), (0, ph), (0, ph)))
    rbb1 = jnp.pad(rbb1, ((0, 0), (0, 0), (0, ph)))
    rbw2 = jnp.pad(rbw2, ((0, 0), (0, ph), (0, ph)))
    rbb2 = jnp.pad(rbb2, ((0, 0), (0, 0), (0, ph)))
    w2 = jnp.pad(w2, ((0, ph), (0, po)))
    b2 = jnp.pad(b2, ((0, 0), (0, po)))

    # Pre-cast MXU operands to bf16 once (no per-forward converts); biases stay f32.
    return (w1.astype(jnp.bfloat16), b1,
            rbw1.astype(jnp.bfloat16), rbb1,
            rbw2.astype(jnp.bfloat16), rbb2,
            w2.astype(jnp.bfloat16), b2)


# ----------------------------------------------------------------------------
# Full model forward (concat fused into a single lane-dense kernel input)
# ----------------------------------------------------------------------------
@functools.partial(jax.jit, static_argnames=("d_out",))
def model_forward(x_num, x_cat, kparams, emb_table, offsets, *, d_out):
    tok = cat_tokenize(x_cat, emb_table, offsets)            # (B, n_tokens, d_token)
    tok_flat = tok.reshape(tok.shape[0], -1)                  # flatten(1, -1)
    x = jnp.concatenate([x_num, tok_flat], axis=1).astype(jnp.bfloat16)
    return mlp_forward(x, kparams)[:, :d_out]


# Pure-JAX f32 reference (uses the unpadded master params)
def model_forward_ref(x_num, x_cat, params, emb_table, offsets):
    (w1, b1, rbw1, rbb1, rbw2, rbb2, w2, b2) = params
    tok = cat_tokenize(x_cat, emb_table, offsets)
    x = jnp.concatenate([x_num, tok.reshape(tok.shape[0], -1)], axis=1)
    h = x @ w1 + b1
    for i in range(rbw1.shape[0]):
        z = jnp.maximum(h @ rbw1[i] + rbb1[i], 0.0)
        z = z @ rbw2[i] + rbb2[i]
        h = h + z
    return h @ w2 + b2


if __name__ == "__main__":
    # Small shapes consistent with the module's forward
    B = 8
    n_num_features = 16
    cat_cardinalities = (5, 7, 3)     # 3 categorical features
    d_token = 16
    d_hidden = 64                     # d_layers = [64, 64, 64]
    n_blocks = 3
    d_out = 1

    key = jax.random.PRNGKey(0)
    k_x, k_c, k_p = jax.random.split(key, 3)

    x_num = jax.random.normal(k_x, (B, n_num_features), jnp.float32)
    x_cat = jnp.stack(
        [jax.random.randint(jax.random.fold_in(k_c, i), (B,), 0, c)
         for i, c in enumerate(cat_cardinalities)], axis=1).astype(jnp.int32)

    params, emb_table, offsets = init_params(
        k_p, n_num_features, d_hidden, n_blocks, d_out,
        cat_cardinalities, d_token)
    kparams = prepare_params(params)          # bf16 + hidden/out padding, once

    out = model_forward(x_num, x_cat, kparams, emb_table, offsets, d_out=d_out)
    out = jax.block_until_ready(out)

    ref = model_forward_ref(x_num, x_cat, params, emb_table, offsets)
    assert out.shape == (B, d_out), out.shape
    # bf16 MXU operands -> relaxed tolerance vs the f32 reference
    assert jnp.allclose(out, ref, atol=2e-2, rtol=2e-2), "mismatch vs reference"

    print("KERNEL_OK")
</pallas_src>

<mosaic_0001>
module attributes {stable_mosaic.version = 11 : i64} {
  func.func @_mlp_kernel(%arg0: i32, %arg1: memref<16x64xbf16, #tpu.memory_space<vmem>>, %arg2: memref<64x128xbf16, #tpu.memory_space<vmem>>, %arg3: memref<1x128xf32, #tpu.memory_space<vmem>>, %arg4: memref<3x128x128xbf16, #tpu.memory_space<vmem>>, %arg5: memref<3x1x128xf32, #tpu.memory_space<vmem>>, %arg6: memref<3x128x128xbf16, #tpu.memory_space<vmem>>, %arg7: memref<3x1x128xf32, #tpu.memory_space<vmem>>, %arg8: memref<128x128xbf16, #tpu.memory_space<vmem>>, %arg9: memref<1x128xf32, #tpu.memory_space<vmem>>, %arg10: memref<16x128xf32, #tpu.memory_space<vmem>>) attributes {dimension_semantics = [#tpu.dimension_semantics<parallel>], iteration_bounds = array<i64: 1>, scalar_prefetch = 0 : i64, scratch_operands = 0 : i64, tpu.core_type = #tpu.core_type<tc>, window_params = [{transform_indices = @transform_0, window_bounds = array<i64: 16, 64>}, {pipeline_mode = #tpu.pipeline_mode<synchronous>, transform_indices = @transform_1, window_bounds = array<i64: 64, 128>}, {pipeline_mode = #tpu.pipeline_mode<synchronous>, transform_indices = @transform_2, window_bounds = array<i64: 1, 128>}, {pipeline_mode = #tpu.pipeline_mode<synchronous>, transform_indices = @transform_3, window_bounds = array<i64: 3, 128, 128>}, {pipeline_mode = #tpu.pipeline_mode<synchronous>, transform_indices = @transform_4, window_bounds = array<i64: 3, 1, 128>}, {pipeline_mode = #tpu.pipeline_mode<synchronous>, transform_indices = @transform_5, window_bounds = array<i64: 3, 128, 128>}, {pipeline_mode = #tpu.pipeline_mode<synchronous>, transform_indices = @transform_6, window_bounds = array<i64: 3, 1, 128>}, {pipeline_mode = #tpu.pipeline_mode<synchronous>, transform_indices = @transform_7, window_bounds = array<i64: 128, 128>}, {pipeline_mode = #tpu.pipeline_mode<synchronous>, transform_indices = @transform_8, window_bounds = array<i64: 1, 128>}, {transform_indices = @transform_9, window_bounds = array<i64: 16, 128>}]} {
    %c0 = arith.constant 0 : index
    %c0_0 = arith.constant 0 : index
    %0 = vector.load %arg1[%c0, %c0_0] : memref<16x64xbf16, #tpu.memory_space<vmem>>, vector<16x64xbf16>
    %c0_1 = arith.constant 0 : index
    %c0_2 = arith.constant 0 : index
    %1 = vector.load %arg2[%c0_1, %c0_2] : memref<64x128xbf16, #tpu.memory_space<vmem>>, vector<64x128xbf16>
    %cst = arith.constant dense<0.000000e+00> : vector<16x128xf32>
    %2 = tpu.matmul %0, %1, %cst {dimension_numbers = #tpu.dot_dimension_numbers<[1], [0], [0], [1], [0, 0, 1, 1], [], []>} : vector<16x64xbf16>, vector<64x128xbf16>, vector<16x128xf32> -> vector<16x128xf32>
    %c0_3 = arith.constant 0 : index
    %c0_4 = arith.constant 0 : index
    %3 = vector.load %arg3[%c0_3, %c0_4] : memref<1x128xf32, #tpu.memory_space<vmem>>, vector<1x128xf32>
    %4 = vector.broadcast %3 : vector<1x128xf32> to vector<16x128xf32>
    %5 = arith.addf %2, %4 : vector<16x128xf32>
    %6 = arith.truncf %5 : vector<16x128xf32> to vector<16x128xbf16>
    %c0_5 = arith.constant 0 : index
    %c0_6 = arith.constant 0 : index
    %c0_7 = arith.constant 0 : index
    %7 = vector.load %arg4[%c0_5, %c0_6, %c0_7] : memref<3x128x128xbf16, #tpu.memory_space<vmem>>, vector<1x128x128xbf16>
    %8 = vector.shape_cast %7 : vector<1x128x128xbf16> to vector<128x128xbf16>
    %cst_8 = arith.constant dense<0.000000e+00> : vector<16x128xf32>
    %9 = tpu.matmul %6, %8, %cst_8 {dimension_numbers = #tpu.dot_dimension_numbers<[1], [0], [0], [1], [0, 0, 1, 1], [], []>} : vector<16x128xbf16>, vector<128x128xbf16>, vector<16x128xf32> -> vector<16x128xf32>
    %c0_9 = arith.constant 0 : index
    %c0_10 = arith.constant 0 : index
    %c0_11 = arith.constant 0 : index
    %10 = vector.load %arg5[%c0_9, %c0_10, %c0_11] : memref<3x1x128xf32, #tpu.memory_space<vmem>>, vector<1x1x128xf32>
    %11 = vector.shape_cast %10 : vector<1x1x128xf32> to vector<1x128xf32>
    %12 = vector.broadcast %11 : vector<1x128xf32> to vector<16x128xf32>
    %13 = arith.addf %9, %12 : vector<16x128xf32>
    %cst_12 = arith.constant 0.000000e+00 : f32
    %14 = vector.broadcast %cst_12 : f32 to vector<16x128xf32>
    %15 = arith.maximumf %13, %14 : vector<16x128xf32>
    %16 = arith.truncf %15 : vector<16x128xf32> to vector<16x128xbf16>
    %c0_13 = arith.constant 0 : index
    %c0_14 = arith.constant 0 : index
    %c0_15 = arith.constant 0 : index
    %17 = vector.load %arg6[%c0_13, %c0_14, %c0_15] : memref<3x128x128xbf16, #tpu.memory_space<vmem>>, vector<1x128x128xbf16>
    %18 = vector.shape_cast %17 : vector<1x128x128xbf16> to vector<128x128xbf16>
    %cst_16 = arith.constant dense<0.000000e+00> : vector<16x128xf32>
    %19 = tpu.matmul %16, %18, %cst_16 {dimension_numbers = #tpu.dot_dimension_numbers<[1], [0], [0], [1], [0, 0, 1, 1], [], []>} : vector<16x128xbf16>, vector<128x128xbf16>, vector<16x128xf32> -> vector<16x128xf32>
    %c0_17 = arith.constant 0 : index
    %c0_18 = arith.constant 0 : index
    %c0_19 = arith.constant 0 : index
    %20 = vector.load %arg7[%c0_17, %c0_18, %c0_19] : memref<3x1x128xf32, #tpu.memory_space<vmem>>, vector<1x1x128xf32>
    %21 = vector.shape_cast %20 : vector<1x1x128xf32> to vector<1x128xf32>
    %22 = vector.broadcast %21 : vector<1x128xf32> to vector<16x128xf32>
    %23 = arith.addf %19, %22 : vector<16x128xf32>
    %24 = arith.addf %5, %23 : vector<16x128xf32>
    %25 = arith.truncf %24 : vector<16x128xf32> to vector<16x128xbf16>
    %c1 = arith.constant 1 : index
    %c0_20 = arith.constant 0 : index
    %c0_21 = arith.constant 0 : index
    %26 = vector.load %arg4[%c1, %c0_20, %c0_21] : memref<3x128x128xbf16, #tpu.memory_space<vmem>>, vector<1x128x128xbf16>
    %27 = vector.shape_cast %26 : vector<1x128x128xbf16> to vector<128x128xbf16>
    %cst_22 = arith.constant dense<0.000000e+00> : vector<16x128xf32>
    %28 = tpu.matmul %25, %27, %cst_22 {dimension_numbers = #tpu.dot_dimension_numbers<[1], [0], [0], [1], [0, 0, 1, 1], [], []>} : vector<16x128xbf16>, vector<128x128xbf16>, vector<16x128xf32> -> vector<16x128xf32>
    %c1_23 = arith.constant 1 : index
    %c0_24 = arith.constant 0 : index
    %c0_25 = arith.constant 0 : index
    %29 = vector.load %arg5[%c1_23, %c0_24, %c0_25] : memref<3x1x128xf32, #tpu.memory_space<vmem>>, vector<1x1x128xf32>
    %30 = vector.shape_cast %29 : vector<1x1x128xf32> to vector<1x128xf32>
    %31 = vector.broadcast %30 : vector<1x128xf32> to vector<16x128xf32>
    %32 = arith.addf %28, %31 : vector<16x128xf32>
    %cst_26 = arith.constant 0.000000e+00 : f32
    %33 = vector.broadcast %cst_26 : f32 to vector<16x128xf32>
    %34 = arith.maximumf %32, %33 : vector<16x128xf32>
    %35 = arith.truncf %34 : vector<16x128xf32> to vector<16x128xbf16>
    %c1_27 = arith.constant 1 : index
    %c0_28 = arith.constant 0 : index
    %c0_29 = arith.constant 0 : index
    %36 = vector.load %arg6[%c1_27, %c0_28, %c0_29] : memref<3x128x128xbf16, #tpu.memory_space<vmem>>, vector<1x128x128xbf16>
    %37 = vector.shape_cast %36 : vector<1x128x128xbf16> to vector<128x128xbf16>
    %cst_30 = arith.constant dense<0.000000e+00> : vector<16x128xf32>
    %38 = tpu.matmul %35, %37, %cst_30 {dimension_numbers = #tpu.dot_dimension_numbers<[1], [0], [0], [1], [0, 0, 1, 1], [], []>} : vector<16x128xbf16>, vector<128x128xbf16>, vector<16x128xf32> -> vector<16x128xf32>
    %c1_31 = arith.constant 1 : index
    %c0_32 = arith.constant 0 : index
    %c0_33 = arith.constant 0 : index
    %39 = vector.load %arg7[%c1_31, %c0_32, %c0_33] : memref<3x1x128xf32, #tpu.memory_space<vmem>>, vector<1x1x128xf32>
    %40 = vector.shape_cast %39 : vector<1x1x128xf32> to vector<1x128xf32>
    %41 = vector.broadcast %40 : vector<1x128xf32> to vector<16x128xf32>
    %42 = arith.addf %38, %41 : vector<16x128xf32>
    %43 = arith.addf %24, %42 : vector<16x128xf32>
    %44 = arith.truncf %43 : vector<16x128xf32> to vector<16x128xbf16>
    %c2 = arith.constant 2 : index
    %c0_34 = arith.constant 0 : index
    %c0_35 = arith.constant 0 : index
    %45 = vector.load %arg4[%c2, %c0_34, %c0_35] : memref<3x128x128xbf16, #tpu.memory_space<vmem>>, vector<1x128x128xbf16>
    %46 = vector.shape_cast %45 : vector<1x128x128xbf16> to vector<128x128xbf16>
    %cst_36 = arith.constant dense<0.000000e+00> : vector<16x128xf32>
    %47 = tpu.matmul %44, %46, %cst_36 {dimension_numbers = #tpu.dot_dimension_numbers<[1], [0], [0], [1], [0, 0, 1, 1], [], []>} : vector<16x128xbf16>, vector<128x128xbf16>, vector<16x128xf32> -> vector<16x128xf32>
    %c2_37 = arith.constant 2 : index
    %c0_38 = arith.constant 0 : index
    %c0_39 = arith.constant 0 : index
    %48 = vector.load %arg5[%c2_37, %c0_38, %c0_39] : memref<3x1x128xf32, #tpu.memory_space<vmem>>, vector<1x1x128xf32>
    %49 = vector.shape_cast %48 : vector<1x1x128xf32> to vector<1x128xf32>
    %50 = vector.broadcast %49 : vector<1x128xf32> to vector<16x128xf32>
    %51 = arith.addf %47, %50 : vector<16x128xf32>
    %cst_40 = arith.constant 0.000000e+00 : f32
    %52 = vector.broadcast %cst_40 : f32 to vector<16x128xf32>
    %53 = arith.maximumf %51, %52 : vector<16x128xf32>
    %54 = arith.truncf %53 : vector<16x128xf32> to vector<16x128xbf16>
    %c2_41 = arith.constant 2 : index
    %c0_42 = arith.constant 0 : index
    %c0_43 = arith.constant 0 : index
    %55 = vector.load %arg6[%c2_41, %c0_42, %c0_43] : memref<3x128x128xbf16, #tpu.memory_space<vmem>>, vector<1x128x128xbf16>
    %56 = vector.shape_cast %55 : vector<1x128x128xbf16> to vector<128x128xbf16>
    %cst_44 = arith.constant dense<0.000000e+00> : vector<16x128xf32>
    %57 = tpu.matmul %54, %56, %cst_44 {dimension_numbers = #tpu.dot_dimension_numbers<[1], [0], [0], [1], [0, 0, 1, 1], [], []>} : vector<16x128xbf16>, vector<128x128xbf16>, vector<16x128xf32> -> vector<16x128xf32>
    %c2_45 = arith.constant 2 : index
    %c0_46 = arith.constant 0 : index
    %c0_47 = arith.constant 0 : index
    %58 = vector.load %arg7[%c2_45, %c0_46, %c0_47] : memref<3x1x128xf32, #tpu.memory_space<vmem>>, vector<1x1x128xf32>
    %59 = vector.shape_cast %58 : vector<1x1x128xf32> to vector<1x128xf32>
    %60 = vector.broadcast %59 : vector<1x128xf32> to vector<16x128xf32>
    %61 = arith.addf %57, %60 : vector<16x128xf32>
    %62 = arith.addf %43, %61 : vector<16x128xf32>
    %63 = arith.truncf %62 : vector<16x128xf32> to vector<16x128xbf16>
    %c0_48 = arith.constant 0 : index
    %c0_49 = arith.constant 0 : index
    %64 = vector.load %arg8[%c0_48, %c0_49] : memref<128x128xbf16, #tpu.memory_space<vmem>>, vector<128x128xbf16>
    %cst_50 = arith.constant dense<0.000000e+00> : vector<16x128xf32>
    %65 = tpu.matmul %63, %64, %cst_50 {dimension_numbers = #tpu.dot_dimension_numbers<[1], [0], [0], [1], [0, 0, 1, 1], [], []>} : vector<16x128xbf16>, vector<128x128xbf16>, vector<16x128xf32> -> vector<16x128xf32>
    %c0_51 = arith.constant 0 : index
    %c0_52 = arith.constant 0 : index
    %66 = vector.load %arg9[%c0_51, %c0_52] : memref<1x128xf32, #tpu.memory_space<vmem>>, vector<1x128xf32>
    %67 = vector.broadcast %66 : vector<1x128xf32> to vector<16x128xf32>
    %68 = arith.addf %65, %67 : vector<16x128xf32>
    %c0_53 = arith.constant 0 : index
    %c0_54 = arith.constant 0 : index
    %69 = vector.load %arg10[%c0_53, %c0_54] : memref<16x128xf32, #tpu.memory_space<vmem>>, vector<16x128xf32>
    tpu.vector_store %arg10[%c0_53, %c0_54], %68 {strides = array<i32>} : memref<16x128xf32, #tpu.memory_space<vmem>>, vector<16x128xf32>,
    return
  }
  func.func @transform_0(%arg0: i32) -> (i32, i32) {
    %c0_i32 = arith.constant 0 : i32
    %c0_i32_0 = arith.constant 0 : i32
    return %arg0, %c0_i32 : i32, i32
  }
  func.func @transform_1(%arg0: i32) -> (i32, i32) {
    %c0_i32 = arith.constant 0 : i32
    %c0_i32_0 = arith.constant 0 : i32
    %c0_i32_1 = arith.constant 0 : i32
    return %c0_i32, %c0_i32_0 : i32, i32
  }
  func.func @transform_2(%arg0: i32) -> (i32, i32) {
    %c0_i32 = arith.constant 0 : i32
    %c0_i32_0 = arith.constant 0 : i32
    %c0_i32_1 = arith.constant 0 : i32
    return %c0_i32, %c0_i32_0 : i32, i32
  }
  func.func @transform_3(%arg0: i32) -> (i32, i32, i32) {
    %c0_i32 = arith.constant 0 : i32
    %c0_i32_0 = arith.constant 0 : i32
    %c0_i32_1 = arith.constant 0 : i32
    %c0_i32_2 = arith.constant 0 : i32
    return %c0_i32, %c0_i32_0, %c0_i32_1 : i32, i32, i32
  }
  func.func @transform_4(%arg0: i32) -> (i32, i32, i32) {
    %c0_i32 = arith.constant 0 : i32
    %c0_i32_0 = arith.constant 0 : i32
    %c0_i32_1 = arith.constant 0 : i32
    %c0_i32_2 = arith.constant 0 : i32
    return %c0_i32, %c0_i32_0, %c0_i32_1 : i32, i32, i32
  }
  func.func @transform_5(%arg0: i32) -> (i32, i32, i32) {
    %c0_i32 = arith.constant 0 : i32
    %c0_i32_0 = arith.constant 0 : i32
    %c0_i32_1 = arith.constant 0 : i32
    %c0_i32_2 = arith.constant 0 : i32
    return %c0_i32, %c0_i32_0, %c0_i32_1 : i32, i32, i32
  }
  func.func @transform_6(%arg0: i32) -> (i32, i32, i32) {
    %c0_i32 = arith.constant 0 : i32
    %c0_i32_0 = arith.constant 0 : i32
    %c0_i32_1 = arith.constant 0 : i32
    %c0_i32_2 = arith.constant 0 : i32
    return %c0_i32, %c0_i32_0, %c0_i32_1 : i32, i32, i32
  }
  func.func @transform_7(%arg0: i32) -> (i32, i32) {
    %c0_i32 = arith.constant 0 : i32
    %c0_i32_0 = arith.constant 0 : i32
    %c0_i32_1 = arith.constant 0 : i32
    return %c0_i32, %c0_i32_0 : i32, i32
  }
  func.func @transform_8(%arg0: i32) -> (i32, i32) {
    %c0_i32 = arith.constant 0 : i32
    %c0_i32_0 = arith.constant 0 : i32
    %c0_i32_1 = arith.constant 0 : i32
    return %c0_i32, %c0_i32_0 : i32, i32
  }
  func.func @transform_9(%arg0: i32) -> (i32, i32) {
    %c0_i32 = arith.constant 0 : i32
    %c0_i32_0 = arith.constant 0 : i32
    return %arg0, %c0_i32 : i32, i32
  }
}

</mosaic_0001>

<llo_original>
// kernel: model_forward.1
$region0: #{model_forward.1}
  #allocation0 [shape = 'u32[]', space=smem, size = 0x4, offset = 0x4, fixed_abs, tag = 'smem constant byte address 0x4 - core index']
  #allocation1 [shape = 'u32[144,128]{1,0:T(1,128)}', space=vmem, size = 0x12000, scoped, tag = 'internal scratch']
  %s0 = inlined_call_operand.vmem [shape: bf16[16,64], index: 0, kind: input, shape index: {}]
  %s1 = inlined_call_operand.vmem [shape: bf16[64,128], index: 1, kind: input, shape index: {}]
  %s2 = inlined_call_operand.vmem [shape: f32[1,128], index: 2, kind: input, shape index: {}]
  %s3 = inlined_call_operand.vmem [shape: bf16[3,128,128], index: 3, kind: input, shape index: {}]
  %s4 = inlined_call_operand.vmem [shape: f32[3,1,128], index: 4, kind: input, shape index: {}]
  %s5 = inlined_call_operand.hbm [shape: bf16[3,128,128], index: 5, kind: input, shape index: {}]
  %s6 = inlined_call_operand.vmem [shape: f32[3,1,128], index: 6, kind: input, shape index: {}]
  %s7 = inlined_call_operand.vmem [shape: bf16[128,128], index: 7, kind: input, shape index: {}]
  %s8 = inlined_call_operand.vmem [shape: f32[1,128], index: 8, kind: input, shape index: {}]
  %s9 = inlined_call_operand.vmem [shape: f32[16,128], index: 9, kind: output, shape index: {}]
  %s10 = sld [smem:[#allocation0]]
  $region50: #{model_forward.1} parent=0
    _
  %s12 = ssub.s32 1, %s10
  %s13 = scalar_select 0, %s12, %s10
  $region1: #{model_forward.1} parent=0
    #allocation2 [shape = 'u8[98304]{0}', space=vmem, size = 0x18000, scoped, tag = 'input window, operand 5, single buffered']
    #allocation3 [shape = 's32[1]{0}', space=sflag, size = 0x4, scoped, tag = 'scoped memory for model_forward.1']
    %14 = vsyncpa [#allocation3], 0
    // Predicated region
    $region2: #{model_forward.1} parent=1 // pred_check
      _
    $region3: #{model_forward.1} parent=1 // pred_check_branch
      %16 = sbr.rel (0) target = $region5
    $region4: #{model_forward.1} parent=1 // pred_region
      _
    $region5: #{model_forward.1} parent=1 // pred_fallthru
      _
    // Predicated region
    $region6: #{model_forward.1} parent=1 // pred_check
      _
    $region7: #{model_forward.1} parent=1 // pred_check_branch
      %18 = sbr.rel (0) target = $region9
    $region8: #{model_forward.1} parent=1 // pred_region
      _
    $region9: #{model_forward.1} parent=1 // pred_fallthru
      _
    // Predicated region
    $region10: #{model_forward.1} parent=1 // pred_check
      _
    $region11: #{model_forward.1} parent=1 // pred_check_branch
      %20 = sbr.rel (0) target = $region13
    $region12: #{model_forward.1} parent=1 // pred_region
      _
    $region13: #{model_forward.1} parent=1 // pred_fallthru
      _
    // Predicated region
    $region14: #{model_forward.1} parent=1 // pred_check
      _
    $region15: #{model_forward.1} parent=1 // pred_check_branch
      %22 = sbr.rel (0) target = $region17
    $region16: #{model_forward.1} parent=1 // pred_region
      _
    $region17: #{model_forward.1} parent=1 // pred_fallthru
      _
    // Predicated region
    $region18: #{model_forward.1} parent=1 // pred_check
      _
    $region19: #{model_forward.1} parent=1 // pred_check_branch
      %24 = sbr.rel (0) target = $region21
    $region20: #{model_forward.1} parent=1 // pred_region
      _
    $region21: #{model_forward.1} parent=1 // pred_fallthru
      _
    // Predicated region
    $region22: #{model_forward.1} parent=1 // pred_check
      _
    $region23: #{model_forward.1} parent=1 // pred_check_branch
      %26 = sbr.rel (0) target = $region25
    $region24: #{model_forward.1} parent=1 // pred_region
      %s28 = ssub.s32 3072, 3072
      %29 = vsyncadd [#allocation3], %s28
      %s30 = sshll.u32 [#allocation2], 4
      %s31 = int_to_ptr.vmem [resolvable:$true] %s30
      %36 = dma.hbm_to_vmem [thread:$0]  %s5, 3072, %s31, [#allocation3], 64, 64, 4
    $region25: #{model_forward.1} parent=1 // pred_fallthru
      _
    // Predicated region
    $region26: #{model_forward.1} parent=1 // pred_check
      _
    $region27: #{model_forward.1} parent=1 // pred_check_branch
      %38 = sbr.rel (0) target = $region29
    $region28: #{model_forward.1} parent=1 // pred_region
      _
    $region29: #{model_forward.1} parent=1 // pred_fallthru
      _
    // Predicated region
    $region30: #{model_forward.1} parent=1 // pred_check
      _
    $region31: #{model_forward.1} parent=1 // pred_check_branch
      %40 = sbr.rel (0) target = $region33
    $region32: #{model_forward.1} parent=1 // pred_region
      _
    $region33: #{model_forward.1} parent=1 // pred_fallthru
      _
    // Predicated region
    $region34: #{model_forward.1} parent=1 // pred_check
      _
    $region35: #{model_forward.1} parent=1 // pred_check_branch
      %42 = sbr.rel (0) target = $region37
    $region36: #{model_forward.1} parent=1 // pred_region
      _
    $region37: #{model_forward.1} parent=1 // pred_fallthru
      _
    // Predicated region
    $region38: #{model_forward.1} parent=1 // pred_check
      _
    $region39: #{model_forward.1} parent=1 // pred_check_branch
      %44 = sbr.rel (0) target = $region41
    $region40: #{model_forward.1} parent=1 // pred_region
      %45 = dma.done [#allocation3], 3072
    $region41: #{model_forward.1} parent=1 // pred_fallthru
      _
    %v47 = vld [vmem:[%s0] sm:$0xf]
    %v48 = vld [vmem:[%s0 + $0x4] sm:$0xf]
    %v49 = vld [vmem:[%s1] sm:$0xf]
    %v50 = vld [vmem:[%s1 + $0x4] sm:$0xf]
    %v51 = vld [vmem:[%s1 + $0x8] sm:$0xf]
    %v52 = vld [vmem:[%s1 + $0xc] sm:$0xf]
    %v53 = vld [vmem:[%s1 + $0x10] sm:$0xf]
    %v54 = vld [vmem:[%s1 + $0x14] sm:$0xf]
    %v55 = vld [vmem:[%s1 + $0x18] sm:$0xf]
    %v56 = vld [vmem:[%s1 + $0x1c] sm:$0xf]
    %v57 = vld [vmem:[%s2] sm:$0x1]
    %v59 = vlaneseq
    %v60 = vshrl.u32 %v59, 7
    %v61 = vsub.s32 0, %v60
    %v62 = vrot.slane %v57, %v61
    %v66 = vunpack.c.l.b16 %v47
    %v67 = vunpack.c.l.b16 %v48
    %v68 = vpack.c.b16 %v67, %v66
    %v77 = vunpack.c.l.b16 %v49
    %v78 = vunpack.c.l.b16 %v50
    %v79 = vunpack.c.l.b16 %v51
    %v80 = vunpack.c.l.b16 %v52
    %v81 = vunpack.c.l.b16 %v53
    %v82 = vunpack.c.l.b16 %v54
    %v83 = vunpack.c.l.b16 %v55
    %v84 = vunpack.c.l.b16 %v56
    %v85 = vpack.c.b16 %v78, %v77
    %v86 = vpack.c.b16 %v80, %v79
    %v87 = vpack.c.b16 %v82, %v81
    %v88 = vpack.c.b16 %v84, %v83
    %vm93 = vcmask 523264
    %v95 = vsel %vm93, %v68, 0
    %97 = vmatprep.subr.bf16.mxu0 0
    %98 = vmatpush1.bf16.msra.mxu0 %v85
    %99 = vmatprep.subr.bf16.mxu0 0
    %100 = vmatpush1.bf16.msra.mxu0 %v86
    %101 = vmatprep.subr.bf16.mxu0 0
    %102 = vmatpush1.bf16.msra.mxu0 %v87
    %103 = vmatprep.subr.bf16.mxu0 0
    %104 = vmatpush1.bf16.msra.mxu0 %v88
    %105 = vmatprep.subr.bf16.mxu0 0
    %106 = vmatpush1.bf16.msra.mxu0 0
    %107 = vmatprep.subr.bf16.mxu0 0
    %108 = vmatpush1.bf16.msra.mxu0 0
    %109 = vmatprep.subr.bf16.mxu0 0
    %110 = vmatpush1.bf16.msra.mxu0 0
    %111 = vmatprep.subr.bf16.mxu0 0
    %112 = vmatpush1.bf16.msra.mxu0 0
    %113 = vmatprep.subr.bf16.mxu0 0
    %114 = vmatpush1.bf16.msra.mxu0 0
    %115 = vmatprep.subr.bf16.mxu0 0
    %116 = vmatpush1.bf16.msra.mxu0 0
    %117 = vmatprep.subr.bf16.mxu0 0
    %118 = vmatpush1.bf16.msra.mxu0 0
    %119 = vmatprep.subr.bf16.mxu0 0
    %120 = vmatpush1.bf16.msra.mxu0 0
    %121 = vmatprep.subr.bf16.mxu0 0
    %122 = vmatpush1.bf16.msra.mxu0 0
    %123 = vmatprep.subr.bf16.mxu0 0
    %124 = vmatpush1.bf16.msra.mxu0 0
    %125 = vmatprep.subr.bf16.mxu0 0
    %126 = vmatpush1.bf16.msra.mxu0 0
    %127 = vmatprep.subr.bf16.mxu0 0
    %128 = vmatpush1.bf16.msra.mxu0 0
    %129 = vmatprep.mubr.bf16.mxu0 0
    %130 = vmatmul.mubr.bf16.gmra.mrb[0].mxu0 %v95
    %v131 = vpop.f32.mrb[0].mxu0
    %v132 = vadd.f32 %v62, %v131
    %v133 = vpop.f32.mrb[0].mxu0
    %v134 = vpop.f32.mrb[0].mxu0
    %v135 = vadd.f32 %v62, %v134
    %v136 = vpop.f32.mrb[0].mxu0
    %137 = vdwg.mxu0
    %v138 = vpack.c.bf16 %v135, %v132
    %v139 = vld [vmem:[%s3] sm:$0xf]
    %v140 = vld [vmem:[%s3 + $0x4] sm:$0xf]
    %v141 = vld [vmem:[%s3 + $0x8] sm:$0xf]
    %v142 = vld [vmem:[%s3 + $0xc] sm:$0xf]
    %v143 = vld [vmem:[%s3 + $0x10] sm:$0xf]
    %v144 = vld [vmem:[%s3 + $0x14] sm:$0xf]
    %v145 = vld [vmem:[%s3 + $0x18] sm:$0xf]
    %v146 = vld [vmem:[%s3 + $0x1c] sm:$0xf]
    %v147 = vld [vmem:[%s3 + $0x20] sm:$0xf]
    %v148 = vld [vmem:[%s3 + $0x24] sm:$0xf]
    %v149 = vld [vmem:[%s3 + $0x28] sm:$0xf]
    %v150 = vld [vmem:[%s3 + $0x2c] sm:$0xf]
    %v151 = vld [vmem:[%s3 + $0x30] sm:$0xf]
    %v152 = vld [vmem:[%s3 + $0x34] sm:$0xf]
    %v153 = vld [vmem:[%s3 + $0x38] sm:$0xf]
    %v154 = vld [vmem:[%s3 + $0x3c] sm:$0xf]
    %v155 = vld [vmem:[%s4] sm:$0x1]
    %v157 = vlaneseq
    %v158 = vshrl.u32 %v157, 7
    %v159 = vsub.s32 0, %v158
    %v160 = vrot.slane %v155, %v159
    %v178 = vunpack.c.l.b16 %v139
    %v179 = vunpack.c.l.b16 %v140
    %v180 = vunpack.c.l.b16 %v141
    %v181 = vunpack.c.l.b16 %v142
    %v182 = vunpack.c.l.b16 %v143
    %v183 = vunpack.c.l.b16 %v144
    %v184 = vunpack.c.l.b16 %v145
    %v185 = vunpack.c.l.b16 %v146
    %v186 = vunpack.c.l.b16 %v147
    %v187 = vunpack.c.l.b16 %v148
    %v188 = vunpack.c.l.b16 %v149
    %v189 = vunpack.c.l.b16 %v150
    %v190 = vunpack.c.l.b16 %v151
    %v191 = vunpack.c.l.b16 %v152
    %v192 = vunpack.c.l.b16 %v153
    %v193 = vunpack.c.l.b16 %v154
    %v194 = vpack.c.b16 %v179, %v178
    %v195 = vpack.c.b16 %v181, %v180
    %v196 = vpack.c.b16 %v183, %v182
    %v197 = vpack.c.b16 %v185, %v184
    %v198 = vpack.c.b16 %v187, %v186
    %v199 = vpack.c.b16 %v189, %v188
    %v200 = vpack.c.b16 %v191, %v190
    %v201 = vpack.c.b16 %v193, %v192
    %210 = vmatprep.subr.bf16.mxu0 0
    %211 = vmatpush1.bf16.msra.mxu0 %v194
    %212 = vmatprep.subr.bf16.mxu0 0
    %213 = vmatpush1.bf16.msra.mxu0 %v195
    %214 = vmatprep.subr.bf16.mxu0 0
    %215 = vmatpush1.bf16.msra.mxu0 %v196
    %216 = vmatprep.subr.bf16.mxu0 0
    %217 = vmatpush1.bf16.msra.mxu0 %v197
    %218 = vmatprep.subr.bf16.mxu0 0
    %219 = vmatpush1.bf16.msra.mxu0 %v198
    %220 = vmatprep.subr.bf16.mxu0 0
    %221 = vmatpush1.bf16.msra.mxu0 %v199
    %222 = vmatprep.subr.bf16.mxu0 0
    %223 = vmatpush1.bf16.msra.mxu0 %v200
    %224 = vmatprep.subr.bf16.mxu0 0
    %225 = vmatpush1.bf16.msra.mxu0 %v201
    %226 = vmatprep.subr.bf16.mxu0 0
    %227 = vmatpush1.bf16.msra.mxu0 0
    %228 = vmatprep.subr.bf16.mxu0 0
    %229 = vmatpush1.bf16.msra.mxu0 0
    %230 = vmatprep.subr.bf16.mxu0 0
    %231 = vmatpush1.bf16.msra.mxu0 0
    %232 = vmatprep.subr.bf16.mxu0 0
    %233 = vmatpush1.bf16.msra.mxu0 0
    %234 = vmatprep.subr.bf16.mxu0 0
    %235 = vmatpush1.bf16.msra.mxu0 0
    %236 = vmatprep.subr.bf16.mxu0 0
    %237 = vmatpush1.bf16.msra.mxu0 0
    %238 = vmatprep.subr.bf16.mxu0 0
    %239 = vmatpush1.bf16.msra.mxu0 0
    %240 = vmatprep.subr.bf16.mxu0 0
    %241 = vmatpush1.bf16.msra.mxu0 0
    %242 = vmatprep.mubr.bf16.mxu0 0
    %243 = vmatmul.mubr.bf16.gmra.mrb[0].mxu0 %v138
    %v244 = vpop.f32.mrb[0].mxu0
    %v245 = vadd.f32 %v160, %v244
    %v246 = vpop.f32.mrb[0].mxu0
    %v247 = vpop.f32.mrb[0].mxu0
    %v248 = vadd.f32 %v160, %v247
    %v249 = vpop.f32.mrb[0].mxu0
    %250 = vdwg.mxu0
    %v251 = vmax.f32 %v245, 0.0
    %v252 = vmax.f32 %v248, 0.0
    %v253 = vpack.c.bf16 %v252, %v251
    %v254 = vld [vmem:[#allocation2] sm:$0xf]
    %v255 = vld [vmem:[#allocation2 + $0x4] sm:$0xf]
    %v256 = vld [vmem:[#allocation2 + $0x8] sm:$0xf]
    %v257 = vld [vmem:[#allocation2 + $0xc] sm:$0xf]
    %v258 = vld [vmem:[#allocation2 + $0x10] sm:$0xf]
    %v259 = vld [vmem:[#allocation2 + $0x14] sm:$0xf]
    %v260 = vld [vmem:[#allocation2 + $0x18] sm:$0xf]
    %v261 = vld [vmem:[#allocation2 + $0x1c] sm:$0xf]
    %v262 = vld [vmem:[#allocation2 + $0x20] sm:$0xf]
    %v263 = vld [vmem:[#allocation2 + $0x24] sm:$0xf]
    %v264 = vld [vmem:[#allocation2 + $0x28] sm:$0xf]
    %v265 = vld [vmem:[#allocation2 + $0x2c] sm:$0xf]
    %v266 = vld [vmem:[#allocation2 + $0x30] sm:$0xf]
    %v267 = vld [vmem:[#allocation2 + $0x34] sm:$0xf]
    %v268 = vld [vmem:[#allocation2 + $0x38] sm:$0xf]
    %v269 = vld [vmem:[#allocation2 + $0x3c] sm:$0xf]
    %v270 = vld [vmem:[%s6] sm:$0x1]
    %v272 = vlaneseq
    %v273 = vshrl.u32 %v272, 7
    %v274 = vsub.s32 0, %v273
    %v275 = vrot.slane %v270, %v274
    %v293 = vunpack.c.l.b16 %v254
    %v294 = vunpack.c.l.b16 %v255
    %v295 = vunpack.c.l.b16 %v256
    %v296 = vunpack.c.l.b16 %v257
    %v297 = vunpack.c.l.b16 %v258
    %v298 = vunpack.c.l.b16 %v259
    %v299 = vunpack.c.l.b16 %v260
    %v300 = vunpack.c.l.b16 %v261
    %v301 = vunpack.c.l.b16 %v262
    %v302 = vunpack.c.l.b16 %v263
    %v303 = vunpack.c.l.b16 %v264
    %v304 = vunpack.c.l.b16 %v265
    %v305 = vunpack.c.l.b16 %v266
    %v306 = vunpack.c.l.b16 %v267
    %v307 = vunpack.c.l.b16 %v268
    %v308 = vunpack.c.l.b16 %v269
    %v309 = vpack.c.b16 %v294, %v293
    %v310 = vpack.c.b16 %v296, %v295
    %v311 = vpack.c.b16 %v298, %v297
    %v312 = vpack.c.b16 %v300, %v299
    %v313 = vpack.c.b16 %v302, %v301
    %v314 = vpack.c.b16 %v304, %v303
    %v315 = vpack.c.b16 %v306, %v305
    %v316 = vpack.c.b16 %v308, %v307
    %325 = vmatprep.subr.bf16.mxu0 0
    %326 = vmatpush1.bf16.msra.mxu0 %v309
    %327 = vmatprep.subr.bf16.mxu0 0
    %328 = vmatpush1.bf16.msra.mxu0 %v310
    %329 = vmatprep.subr.bf16.mxu0 0
    %330 = vmatpush1.bf16.msra.mxu0 %v311
    %331 = vmatprep.subr.bf16.mxu0 0
    %332 = vmatpush1.bf16.msra.mxu0 %v312
    %333 = vmatprep.subr.bf16.mxu0 0
    %334 = vmatpush1.bf16.msra.mxu0 %v313
    %335 = vmatprep.subr.bf16.mxu0 0
    %336 = vmatpush1.bf16.msra.mxu0 %v314
    %337 = vmatprep.subr.bf16.mxu0 0
    %338 = vmatpush1.bf16.msra.mxu0 %v315
    %339 = vmatprep.subr.bf16.mxu0 0
    %340 = vmatpush1.bf16.msra.mxu0 %v316
    %341 = vmatprep.subr.bf16.mxu0 0
    %342 = vmatpush1.bf16.msra.mxu0 0
    %343 = vmatprep.subr.bf16.mxu0 0
    %344 = vmatpush1.bf16.msra.mxu0 0
    %345 = vmatprep.subr.bf16.mxu0 0
    %346 = vmatpush1.bf16.msra.mxu0 0
    %347 = vmatprep.subr.bf16.mxu0 0
    %348 = vmatpush1.bf16.msra.mxu0 0
    %349 = vmatprep.subr.bf16.mxu0 0
    %350 = vmatpush1.bf16.msra.mxu0 0
    %351 = vmatprep.subr.bf16.mxu0 0
    %352 = vmatpush1.bf16.msra.mxu0 0
    %353 = vmatprep.subr.bf16.mxu0 0
    %354 = vmatpush1.bf16.msra.mxu0 0
    %355 = vmatprep.subr.bf16.mxu0 0
    %356 = vmatpush1.bf16.msra.mxu0 0
    %357 = vmatprep.mubr.bf16.mxu0 0
    %358 = vmatmul.mubr.bf16.gmra.mrb[0].mxu0 %v253
    %v359 = vpop.f32.mrb[0].mxu0
    %v360 = vadd.f32 %v275, %v359
    %v361 = vpop.f32.mrb[0].mxu0
    %v362 = vpop.f32.mrb[0].mxu0
    %v363 = vadd.f32 %v275, %v362
    %v364 = vpop.f32.mrb[0].mxu0
    %365 = vdwg.mxu0
    %v366 = vadd.f32 %v132, %v360
    %v367 = vadd.f32 %v135, %v363
    %v368 = vpack.c.bf16 %v367, %v366
    %s369 = scalar_lea.vmem %s3, 64
    %v370 = vld [vmem:[%s369] sm:$0xf]
    %v371 = vld [vmem:[%s369 + $0x4] sm:$0xf]
    %v372 = vld [vmem:[%s369 + $0x8] sm:$0xf]
    %v373 = vld [vmem:[%s369 + $0xc] sm:$0xf]
    %v374 = vld [vmem:[%s369 + $0x10] sm:$0xf]
    %v375 = vld [vmem:[%s369 + $0x14] sm:$0xf]
    %v376 = vld [vmem:[%s369 + $0x18] sm:$0xf]
    %v377 = vld [vmem:[%s369 + $0x1c] sm:$0xf]
    %v378 = vld [vmem:[%s369 + $0x20] sm:$0xf]
    %v379 = vld [vmem:[%s369 + $0x24] sm:$0xf]
    %v380 = vld [vmem:[%s369 + $0x28] sm:$0xf]
    %v381 = vld [vmem:[%s369 + $0x2c] sm:$0xf]
    %v382 = vld [vmem:[%s369 + $0x30] sm:$0xf]
    %v383 = vld [vmem:[%s369 + $0x34] sm:$0xf]
    %v384 = vld [vmem:[%s369 + $0x38] sm:$0xf]
    %v385 = vld [vmem:[%s369 + $0x3c] sm:$0xf]
    %s386 = scalar_lea.vmem %s4, 1
    %v387 = vld [vmem:[%s386] sm:$0x1]
    %v389 = vlaneseq
    %v390 = vshrl.u32 %v389, 7
    %v391 = vsub.s32 0, %v390
    %v392 = vrot.slane %v387, %v391
    %v410 = vunpack.c.l.b16 %v370
    %v411 = vunpack.c.l.b16 %v371
    %v412 = vunpack.c.l.b16 %v372
    %v413 = vunpack.c.l.b16 %v373
    %v414 = vunpack.c.l.b16 %v374
    %v415 = vunpack.c.l.b16 %v375
    %v416 = vunpack.c.l.b16 %v376
    %v417 = vunpack.c.l.b16 %v377
    %v418 = vunpack.c.l.b16 %v378
    %v419 = vunpack.c.l.b16 %v379
    %v420 = vunpack.c.l.b16 %v380
    %v421 = vunpack.c.l.b16 %v381
    %v422 = vunpack.c.l.b16 %v382
    %v423 = vunpack.c.l.b16 %v383
    %v424 = vunpack.c.l.b16 %v384
    %v425 = vunpack.c.l.b16 %v385
    %v426 = vpack.c.b16 %v411, %v410
    %v427 = vpack.c.b16 %v413, %v412
    %v428 = vpack.c.b16 %v415, %v414
    %v429 = vpack.c.b16 %v417, %v416
    %v430 = vpack.c.b16 %v419, %v418
    %v431 = vpack.c.b16 %v421, %v420
    %v432 = vpack.c.b16 %v423, %v422
    %v433 = vpack.c.b16 %v425, %v424
    %442 = vmatprep.subr.bf16.mxu0 0
    %443 = vmatpush1.bf16.msra.mxu0 %v426
    %444 = vmatprep.subr.bf16.mxu0 0
    %445 = vmatpush1.bf16.msra.mxu0 %v427
    %446 = vmatprep.subr.bf16.mxu0 0
    %447 = vmatpush1.bf16.msra.mxu0 %v428
    %448 = vmatprep.subr.bf16.mxu0 0
    %449 = vmatpush1.bf16.msra.mxu0 %v429
    %450 = vmatprep.subr.bf16.mxu0 0
    %451 = vmatpush1.bf16.msra.mxu0 %v430
    %452 = vmatprep.subr.bf16.mxu0 0
    %453 = vmatpush1.bf16.msra.mxu0 %v431
    %454 = vmatprep.subr.bf16.mxu0 0
    %455 = vmatpush1.bf16.msra.mxu0 %v432
    %456 = vmatprep.subr.bf16.mxu0 0
    %457 = vmatpush1.bf16.msra.mxu0 %v433
    %458 = vmatprep.subr.bf16.mxu0 0
    %459 = vmatpush1.bf16.msra.mxu0 0
    %460 = vmatprep.subr.bf16.mxu0 0
    %461 = vmatpush1.bf16.msra.mxu0 0
    %462 = vmatprep.subr.bf16.mxu0 0
    %463 = vmatpush1.bf16.msra.mxu0 0
    %464 = vmatprep.subr.bf16.mxu0 0
    %465 = vmatpush1.bf16.msra.mxu0 0
    %466 = vmatprep.subr.bf16.mxu0 0
    %467 = vmatpush1.bf16.msra.mxu0 0
    %468 = vmatprep.subr.bf16.mxu0 0
    %469 = vmatpush1.bf16.msra.mxu0 0
    %470 = vmatprep.subr.bf16.mxu0 0
    %471 = vmatpush1.bf16.msra.mxu0 0
    %472 = vmatprep.subr.bf16.mxu0 0
    %473 = vmatpush1.bf16.msra.mxu0 0
    %474 = vmatprep.mubr.bf16.mxu0 0
    %475 = vmatmul.mubr.bf16.gmra.mrb[0].mxu0 %v368
    %v476 = vpop.f32.mrb[0].mxu0
    %v477 = vadd.f32 %v392, %v476
    %v478 = vpop.f32.mrb[0].mxu0
    %v479 = vpop.f32.mrb[0].mxu0
    %v480 = vadd.f32 %v392, %v479
    %v481 = vpop.f32.mrb[0].mxu0
    %482 = vdwg.mxu0
    %v483 = vmax.f32 %v477, 0.0
    %v484 = vmax.f32 %v480, 0.0
    %v485 = vpack.c.bf16 %v484, %v483
    %s486 = scalar_lea.vmem [#allocation2], 64
    %v487 = vld [vmem:[%s486] sm:$0xf]
    %v488 = vld [vmem:[%s486 + $0x4] sm:$0xf]
    %v489 = vld [vmem:[%s486 + $0x8] sm:$0xf]
    %v490 = vld [vmem:[%s486 + $0xc] sm:$0xf]
    %v491 = vld [vmem:[%s486 + $0x10] sm:$0xf]
    %v492 = vld [vmem:[%s486 + $0x14] sm:$0xf]
    %v493 = vld [vmem:[%s486 + $0x18] sm:$0xf]
    %v494 = vld [vmem:[%s486 + $0x1c] sm:$0xf]
    %v495 = vld [vmem:[%s486 + $0x20] sm:$0xf]
    %v496 = vld [vmem:[%s486 + $0x24] sm:$0xf]
    %v497 = vld [vmem:[%s486 + $0x28] sm:$0xf]
    %v498 = vld [vmem:[%s486 + $0x2c] sm:$0xf]
    %v499 = vld [vmem:[%s486 + $0x30] sm:$0xf]
    %v500 = vld [vmem:[%s486 + $0x34] sm:$0xf]
    %v501 = vld [vmem:[%s486 + $0x38] sm:$0xf]
    %v502 = vld [vmem:[%s486 + $0x3c] sm:$0xf]
    %s503 = scalar_lea.vmem %s6, 1
    %v504 = vld [vmem:[%s503] sm:$0x1]
    %v506 = vlaneseq
    %v507 = vshrl.u32 %v506, 7
    %v508 = vsub.s32 0, %v507
    %v509 = vrot.slane %v504, %v508
    %v527 = vunpack.c.l.b16 %v487
    %v528 = vunpack.c.l.b16 %v488
    %v529 = vunpack.c.l.b16 %v489
    %v530 = vunpack.c.l.b16 %v490
    %v531 = vunpack.c.l.b16 %v491
    %v532 = vunpack.c.l.b16 %v492
    %v533 = vunpack.c.l.b16 %v493
    %v534 = vunpack.c.l.b16 %v494
    %v535 = vunpack.c.l.b16 %v495
    %v536 = vunpack.c.l.b16 %v496
    %v537 = vunpack.c.l.b16 %v497
    %v538 = vunpack.c.l.b16 %v498
    %v539 = vunpack.c.l.b16 %v499
    %v540 = vunpack.c.l.b16 %v500
    %v541 = vunpack.c.l.b16 %v501
    %v542 = vunpack.c.l.b16 %v502
    %v543 = vpack.c.b16 %v528, %v527
    %v544 = vpack.c.b16 %v530, %v529
    %v545 = vpack.c.b16 %v532, %v531
    %v546 = vpack.c.b16 %v534, %v533
    %v547 = vpack.c.b16 %v536, %v535
    %v548 = vpack.c.b16 %v538, %v537
    %v549 = vpack.c.b16 %v540, %v539
    %v550 = vpack.c.b16 %v542, %v541
    %559 = vmatprep.subr.bf16.mxu0 0
    %560 = vmatpush1.bf16.msra.mxu0 %v543
    %561 = vmatprep.subr.bf16.mxu0 0
    %562 = vmatpush1.bf16.msra.mxu0 %v544
    %563 = vmatprep.subr.bf16.mxu0 0
    %564 = vmatpush1.bf16.msra.mxu0 %v545
    %565 = vmatprep.subr.bf16.mxu0 0
    %566 = vmatpush1.bf16.msra.mxu0 %v546
    %567 = vmatprep.subr.bf16.mxu0 0
    %568 = vmatpush1.bf16.msra.mxu0 %v547
    %569 = vmatprep.subr.bf16.mxu0 0
    %570 = vmatpush1.bf16.msra.mxu0 %v548
    %571 = vmatprep.subr.bf16.mxu0 0
    %572 = vmatpush1.bf16.msra.mxu0 %v549
    %573 = vmatprep.subr.bf16.mxu0 0
    %574 = vmatpush1.bf16.msra.mxu0 %v550
    %575 = vmatprep.subr.bf16.mxu0 0
    %576 = vmatpush1.bf16.msra.mxu0 0
    %577 = vmatprep.subr.bf16.mxu0 0
    %578 = vmatpush1.bf16.msra.mxu0 0
    %579 = vmatprep.subr.bf16.mxu0 0
    %580 = vmatpush1.bf16.msra.mxu0 0
    %581 = vmatprep.subr.bf16.mxu0 0
    %582 = vmatpush1.bf16.msra.mxu0 0
    %583 = vmatprep.subr.bf16.mxu0 0
    %584 = vmatpush1.bf16.msra.mxu0 0
    %585 = vmatprep.subr.bf16.mxu0 0
    %586 = vmatpush1.bf16.msra.mxu0 0
    %587 = vmatprep.subr.bf16.mxu0 0
    %588 = vmatpush1.bf16.msra.mxu0 0
    %589 = vmatprep.subr.bf16.mxu0 0
    %590 = vmatpush1.bf16.msra.mxu0 0
    %591 = vmatprep.mubr.bf16.mxu0 0
    %592 = vmatmul.mubr.bf16.gmra.mrb[0].mxu0 %v485
    %v593 = vpop.f32.mrb[0].mxu0
    %v594 = vadd.f32 %v509, %v593
    %v595 = vpop.f32.mrb[0].mxu0
    %v596 = vpop.f32.mrb[0].mxu0
    %v597 = vadd.f32 %v509, %v596
    %v598 = vpop.f32.mrb[0].mxu0
    %599 = vdwg.mxu0
    %v600 = vadd.f32 %v366, %v594
    %v601 = vadd.f32 %v367, %v597
    %v602 = vpack.c.bf16 %v601, %v600
    %s603 = scalar_lea.vmem %s3, 128
    %v604 = vld [vmem:[%s603] sm:$0xf]
    %v605 = vld [vmem:[%s603 + $0x4] sm:$0xf]
    %v606 = vld [vmem:[%s603 + $0x8] sm:$0xf]
    %v607 = vld [vmem:[%s603 + $0xc] sm:$0xf]
    %v608 = vld [vmem:[%s603 + $0x10] sm:$0xf]
    %v609 = vld [vmem:[%s603 + $0x14] sm:$0xf]
    %v610 = vld [vmem:[%s603 + $0x18] sm:$0xf]
    %v611 = vld [vmem:[%s603 + $0x1c] sm:$0xf]
    %v612 = vld [vmem:[%s603 + $0x20] sm:$0xf]
    %v613 = vld [vmem:[%s603 + $0x24] sm:$0xf]
    %v614 = vld [vmem:[%s603 + $0x28] sm:$0xf]
    %v615 = vld [vmem:[%s603 + $0x2c] sm:$0xf]
    %v616 = vld [vmem:[%s603 + $0x30] sm:$0xf]
    %v617 = vld [vmem:[%s603 + $0x34] sm:$0xf]
    %v618 = vld [vmem:[%s603 + $0x38] sm:$0xf]
    %v619 = vld [vmem:[%s603 + $0x3c] sm:$0xf]
    %s620 = scalar_lea.vmem %s4, 2
    %v621 = vld [vmem:[%s620] sm:$0x1]
    %v623 = vlaneseq
    %v624 = vshrl.u32 %v623, 7
    %v625 = vsub.s32 0, %v624
    %v626 = vrot.slane %v621, %v625
    %v644 = vunpack.c.l.b16 %v604
    %v645 = vunpack.c.l.b16 %v605
    %v646 = vunpack.c.l.b16 %v606
    %v647 = vunpack.c.l.b16 %v607
    %v648 = vunpack.c.l.b16 %v608
    %v649 = vunpack.c.l.b16 %v609
    %v650 = vunpack.c.l.b16 %v610
    %v651 = vunpack.c.l.b16 %v611
    %v652 = vunpack.c.l.b16 %v612
    %v653 = vunpack.c.l.b16 %v613
    %v654 = vunpack.c.l.b16 %v614
    %v655 = vunpack.c.l.b16 %v615
    %v656 = vunpack.c.l.b16 %v616
    %v657 = vunpack.c.l.b16 %v617
    %v658 = vunpack.c.l.b16 %v618
    %v659 = vunpack.c.l.b16 %v619
    %v660 = vpack.c.b16 %v645, %v644
    %v661 = vpack.c.b16 %v647, %v646
    %v662 = vpack.c.b16 %v649, %v648
    %v663 = vpack.c.b16 %v651, %v650
    %v664 = vpack.c.b16 %v653, %v652
    %v665 = vpack.c.b16 %v655, %v654
    %v666 = vpack.c.b16 %v657, %v656
    %v667 = vpack.c.b16 %v659, %v658
    %676 = vmatprep.subr.bf16.mxu0 0
    %677 = vmatpush1.bf16.msra.mxu0 %v660
    %678 = vmatprep.subr.bf16.mxu0 0
    %679 = vmatpush1.bf16.msra.mxu0 %v661
    %680 = vmatprep.subr.bf16.mxu0 0
    %681 = vmatpush1.bf16.msra.mxu0 %v662
    %682 = vmatprep.subr.bf16.mxu0 0
    %683 = vmatpush1.bf16.msra.mxu0 %v663
    %684 = vmatprep.subr.bf16.mxu0 0
    %685 = vmatpush1.bf16.msra.mxu0 %v664
    %686 = vmatprep.subr.bf16.mxu0 0
    %687 = vmatpush1.bf16.msra.mxu0 %v665
    %688 = vmatprep.subr.bf16.mxu0 0
    %689 = vmatpush1.bf16.msra.mxu0 %v666
    %690 = vmatprep.subr.bf16.mxu0 0
    %691 = vmatpush1.bf16.msra.mxu0 %v667
    %692 = vmatprep.subr.bf16.mxu0 0
    %693 = vmatpush1.bf16.msra.mxu0 0
    %694 = vmatprep.subr.bf16.mxu0 0
    %695 = vmatpush1.bf16.msra.mxu0 0
    %696 = vmatprep.subr.bf16.mxu0 0
    %697 = vmatpush1.bf16.msra.mxu0 0
    %698 = vmatprep.subr.bf16.mxu0 0
    %699 = vmatpush1.bf16.msra.mxu0 0
    %700 = vmatprep.subr.bf16.mxu0 0
    %701 = vmatpush1.bf16.msra.mxu0 0
    %702 = vmatprep.subr.bf16.mxu0 0
    %703 = vmatpush1.bf16.msra.mxu0 0
    %704 = vmatprep.subr.bf16.mxu0 0
    %705 = vmatpush1.bf16.msra.mxu0 0
    %706 = vmatprep.subr.bf16.mxu0 0
    %707 = vmatpush1.bf16.msra.mxu0 0
    %708 = vmatprep.mubr.bf16.mxu0 0
    %709 = vmatmul.mubr.bf16.gmra.mrb[0].mxu0 %v602
    %v710 = vpop.f32.mrb[0].mxu0
    %v711 = vadd.f32 %v626, %v710
    %v712 = vpop.f32.mrb[0].mxu0
    %v713 = vpop.f32.mrb[0].mxu0
    %v714 = vadd.f32 %v626, %v713
    %v715 = vpop.f32.mrb[0].mxu0
    %716 = vdwg.mxu0
    %v717 = vmax.f32 %v711, 0.0
    %v718 = vmax.f32 %v714, 0.0
    %v719 = vpack.c.bf16 %v718, %v717
    %s720 = scalar_lea.vmem [#allocation2], 128
    %v721 = vld [vmem:[%s720] sm:$0xf]
    %v722 = vld [vmem:[%s720 + $0x4] sm:$0xf]
    %v723 = vld [vmem:[%s720 + $0x8] sm:$0xf]
    %v724 = vld [vmem:[%s720 + $0xc] sm:$0xf]
    %v725 = vld [vmem:[%s720 + $0x10] sm:$0xf]
    %v726 = vld [vmem:[%s720 + $0x14] sm:$0xf]
    %v727 = vld [vmem:[%s720 + $0x18] sm:$0xf]
    %v728 = vld [vmem:[%s720 + $0x1c] sm:$0xf]
    %v729 = vld [vmem:[%s720 + $0x20] sm:$0xf]
    %v730 = vld [vmem:[%s720 + $0x24] sm:$0xf]
    %v731 = vld [vmem:[%s720 + $0x28] sm:$0xf]
    %v732 = vld [vmem:[%s720 + $0x2c] sm:$0xf]
    %v733 = vld [vmem:[%s720 + $0x30] sm:$0xf]
    %v734 = vld [vmem:[%s720 + $0x34] sm:$0xf]
    %v735 = vld [vmem:[%s720 + $0x38] sm:$0xf]
    %v736 = vld [vmem:[%s720 + $0x3c] sm:$0xf]
    %s737 = scalar_lea.vmem %s6, 2
    %v738 = vld [vmem:[%s737] sm:$0x1]
    %v740 = vlaneseq
    %v741 = vshrl.u32 %v740, 7
    %v742 = vsub.s32 0, %v741
    %v743 = vrot.slane %v738, %v742
    %v761 = vunpack.c.l.b16 %v721
    %v762 = vunpack.c.l.b16 %v722
    %v763 = vunpack.c.l.b16 %v723
    %v764 = vunpack.c.l.b16 %v724
    %v765 = vunpack.c.l.b16 %v725
    %v766 = vunpack.c.l.b16 %v726
    %v767 = vunpack.c.l.b16 %v727
    %v768 = vunpack.c.l.b16 %v728
    %v769 = vunpack.c.l.b16 %v729
    %v770 = vunpack.c.l.b16 %v730
    %v771 = vunpack.c.l.b16 %v731
    %v772 = vunpack.c.l.b16 %v732
    %v773 = vunpack.c.l.b16 %v733
    %v774 = vunpack.c.l.b16 %v734
    %v775 = vunpack.c.l.b16 %v735
    %v776 = vunpack.c.l.b16 %v736
    %v777 = vpack.c.b16 %v762, %v761
    %v778 = vpack.c.b16 %v764, %v763
    %v779 = vpack.c.b16 %v766, %v765
    %v780 = vpack.c.b16 %v768, %v767
    %v781 = vpack.c.b16 %v770, %v769
    %v782 = vpack.c.b16 %v772, %v771
    %v783 = vpack.c.b16 %v774, %v773
    %v784 = vpack.c.b16 %v776, %v775
    %793 = vmatprep.subr.bf16.mxu0 0
    %794 = vmatpush1.bf16.msra.mxu0 %v777
    %795 = vmatprep.subr.bf16.mxu0 0
    %796 = vmatpush1.bf16.msra.mxu0 %v778
    %797 = vmatprep.subr.bf16.mxu0 0
    %798 = vmatpush1.bf16.msra.mxu0 %v779
    %799 = vmatprep.subr.bf16.mxu0 0
    %800 = vmatpush1.bf16.msra.mxu0 %v780
    %801 = vmatprep.subr.bf16.mxu0 0
    %802 = vmatpush1.bf16.msra.mxu0 %v781
    %803 = vmatprep.subr.bf16.mxu0 0
    %804 = vmatpush1.bf16.msra.mxu0 %v782
    %805 = vmatprep.subr.bf16.mxu0 0
    %806 = vmatpush1.bf16.msra.mxu0 %v783
    %807 = vmatprep.subr.bf16.mxu0 0
    %808 = vmatpush1.bf16.msra.mxu0 %v784
    %809 = vmatprep.subr.bf16.mxu0 0
    %810 = vmatpush1.bf16.msra.mxu0 0
    %811 = vmatprep.subr.bf16.mxu0 0
    %812 = vmatpush1.bf16.msra.mxu0 0
    %813 = vmatprep.subr.bf16.mxu0 0
    %814 = vmatpush1.bf16.msra.mxu0 0
    %815 = vmatprep.subr.bf16.mxu0 0
    %816 = vmatpush1.bf16.msra.mxu0 0
    %817 = vmatprep.subr.bf16.mxu0 0
    %818 = vmatpush1.bf16.msra.mxu0 0
    %819 = vmatprep.subr.bf16.mxu0 0
    %820 = vmatpush1.bf16.msra.mxu0 0
    %821 = vmatprep.subr.bf16.mxu0 0
    %822 = vmatpush1.bf16.msra.mxu0 0
    %823 = vmatprep.subr.bf16.mxu0 0
    %824 = vmatpush1.bf16.msra.mxu0 0
    %825 = vmatprep.mubr.bf16.mxu0 0
    %826 = vmatmul.mubr.bf16.gmra.mrb[0].mxu0 %v719
    %v827 = vpop.f32.mrb[0].mxu0
    %v828 = vadd.f32 %v743, %v827
    %v829 = vpop.f32.mrb[0].mxu0
    %v830 = vpop.f32.mrb[0].mxu0
    %v831 = vadd.f32 %v743, %v830
    %v832 = vpop.f32.mrb[0].mxu0
    %833 = vdwg.mxu0
    %v834 = vadd.f32 %v600, %v828
    %v835 = vadd.f32 %v601, %v831
    %v836 = vpack.c.bf16 %v835, %v834
    %v837 = vld [vmem:[%s7] sm:$0xf]
    %v838 = vld [vmem:[%s7 + $0x4] sm:$0xf]
    %v839 = vld [vmem:[%s7 + $0x8] sm:$0xf]
    %v840 = vld [vmem:[%s7 + $0xc] sm:$0xf]
    %v841 = vld [vmem:[%s7 + $0x10] sm:$0xf]
    %v842 = vld [vmem:[%s7 + $0x14] sm:$0xf]
    %v843 = vld [vmem:[%s7 + $0x18] sm:$0xf]
    %v844 = vld [vmem:[%s7 + $0x1c] sm:$0xf]
    %v845 = vld [vmem:[%s7 + $0x20] sm:$0xf]
    %v846 = vld [vmem:[%s7 + $0x24] sm:$0xf]
    %v847 = vld [vmem:[%s7 + $0x28] sm:$0xf]
    %v848 = vld [vmem:[%s7 + $0x2c] sm:$0xf]
    %v849 = vld [vmem:[%s7 + $0x30] sm:$0xf]
    %v850 = vld [vmem:[%s7 + $0x34] sm:$0xf]
    %v851 = vld [vmem:[%s7 + $0x38] sm:$0xf]
    %v852 = vld [vmem:[%s7 + $0x3c] sm:$0xf]
    %v853 = vld [vmem:[%s8] sm:$0x1]
    %v855 = vlaneseq
    %v856 = vshrl.u32 %v855, 7
    %v857 = vsub.s32 0, %v856
    %v858 = vrot.slane %v853, %v857
    %v876 = vunpack.c.l.b16 %v837
    %v877 = vunpack.c.l.b16 %v838
    %v878 = vunpack.c.l.b16 %v839
    %v879 = vunpack.c.l.b16 %v840
    %v880 = vunpack.c.l.b16 %v841
    %v881 = vunpack.c.l.b16 %v842
    %v882 = vunpack.c.l.b16 %v843
    %v883 = vunpack.c.l.b16 %v844
    %v884 = vunpack.c.l.b16 %v845
    %v885 = vunpack.c.l.b16 %v846
    %v886 = vunpack.c.l.b16 %v847
    %v887 = vunpack.c.l.b16 %v848
    %v888 = vunpack.c.l.b16 %v849
    %v889 = vunpack.c.l.b16 %v850
    %v890 = vunpack.c.l.b16 %v851
    %v891 = vunpack.c.l.b16 %v852
    %v892 = vpack.c.b16 %v877, %v876
    %v893 = vpack.c.b16 %v879, %v878
    %v894 = vpack.c.b16 %v881, %v880
    %v895 = vpack.c.b16 %v883, %v882
    %v896 = vpack.c.b16 %v885, %v884
    %v897 = vpack.c.b16 %v887, %v886
    %v898 = vpack.c.b16 %v889, %v888
    %v899 = vpack.c.b16 %v891, %v890
    %908 = vmatprep.subr.bf16.mxu0 0
    %909 = vmatpush1.bf16.msra.mxu0 %v892
    %910 = vmatprep.subr.bf16.mxu0 0
    %911 = vmatpush1.bf16.msra.mxu0 %v893
    %912 = vmatprep.subr.bf16.mxu0 0
    %913 = vmatpush1.bf16.msra.mxu0 %v894
    %914 = vmatprep.subr.bf16.mxu0 0
    %915 = vmatpush1.bf16.msra.mxu0 %v895
    %916 = vmatprep.subr.bf16.mxu0 0
    %917 = vmatpush1.bf16.msra.mxu0 %v896
    %918 = vmatprep.subr.bf16.mxu0 0
    %919 = vmatpush1.bf16.msra.mxu0 %v897
    %920 = vmatprep.subr.bf16.mxu0 0
    %921 = vmatpush1.bf16.msra.mxu0 %v898
    %922 = vmatprep.subr.bf16.mxu0 0
    %923 = vmatpush1.bf16.msra.mxu0 %v899
    %924 = vmatprep.subr.bf16.mxu0 0
    %925 = vmatpush1.bf16.msra.mxu0 0
    %926 = vmatprep.subr.bf16.mxu0 0
    %927 = vmatpush1.bf16.msra.mxu0 0
    %928 = vmatprep.subr.bf16.mxu0 0
    %929 = vmatpush1.bf16.msra.mxu0 0
    %930 = vmatprep.subr.bf16.mxu0 0
    %931 = vmatpush1.bf16.msra.mxu0 0
    %932 = vmatprep.subr.bf16.mxu0 0
    %933 = vmatpush1.bf16.msra.mxu0 0
    %934 = vmatprep.subr.bf16.mxu0 0
    %935 = vmatpush1.bf16.msra.mxu0 0
    %936 = vmatprep.subr.bf16.mxu0 0
    %937 = vmatpush1.bf16.msra.mxu0 0
    %938 = vmatprep.subr.bf16.mxu0 0
    %939 = vmatpush1.bf16.msra.mxu0 0
    %940 = vmatprep.mubr.bf16.mxu0 0
    %941 = vmatmul.mubr.bf16.gmra.mrb[0].mxu0 %v836
    %v942 = vpop.f32.mrb[0].mxu0
    %v943 = vadd.f32 %v858, %v942
    %v944 = vpop.f32.mrb[0].mxu0
    %v945 = vpop.f32.mrb[0].mxu0
    %v946 = vadd.f32 %v858, %v945
    %v947 = vpop.f32.mrb[0].mxu0
    %948 = vdwg.mxu0
    %949 = vst [vmem:[%s9] sm:$0xff] %v943
    %950 = vst [vmem:[%s9 + $0x8] sm:$0xff] %v946
    // Predicated region
    $region42: #{model_forward.1} parent=1 // pred_check
      _
    $region43: #{model_forward.1} parent=1 // pred_check_branch
      %952 = sbr.rel (0) target = $region45
    $region44: #{model_forward.1} parent=1 // pred_region
      _
    $region45: #{model_forward.1} parent=1 // pred_fallthru
      _
    // Predicated region
    $region46: #{model_forward.1} parent=1 // pred_check
      _
    $region47: #{model_forward.1} parent=1 // pred_check_branch
      %954 = sbr.rel (0) target = $region49
    $region48: #{model_forward.1} parent=1 // pred_region
      _
    $region49: #{model_forward.1} parent=1 // pred_fallthru
      _
    %955 = vsyncpa [#allocation3], 1

</llo_original>
